<compile_context>
chip_gen: v6e
topology: v6e:2x2x1
jax: 0.10.0
libtpu: 0.0.40
codegen_flags: <defaults>
</compile_context>

<pallas_src>
import functools

import jax
import jax.numpy as jnp
from jax.experimental import pallas as pl
from jax.experimental.pallas import tpu as pltpu


# --------------------------------------------------------------------------- #
# Pallas kernel: fused (mu | log_var) MLP + reparameterization, batch on lanes.
# --------------------------------------------------------------------------- #
def vi_kernel(x_ref, eps_ref,
              w1_ref, b1_ref, w2_ref, b2_ref, w3_ref, b3_ref,
              z_ref, mu_ref, lv_ref):
    x = x_ref[...]          # (1, TM)   batch along lanes
    eps = eps_ref[...]      # (1, TM)

    # Layer 1 (fan_in = 1): sublane broadcast + VPU, no MXU.   -> (40, TM)
    h = jnp.maximum(w1_ref[...] * x + b1_ref[...], 0.0)

    # Layer 2: fused block-diagonal (40 -> 20) matmul (the only real dot).
    h = jnp.dot(w2_ref[...], h, preferred_element_type=jnp.float32)
    h = jnp.maximum(h + b2_ref[...], 0.0)                      # (20, TM)

    # Layer 3: both 1-wide heads as one (2,20) @ (20,TM) dot.
    out = jnp.dot(w3_ref[...], h, preferred_element_type=jnp.float32) + b3_ref[...]
    mu = out[0:1, :]                                            # (1, TM)
    lv = out[1:2, :]                                            # (1, TM)

    sigma = jnp.exp(0.5 * lv) + 1e-5
    z_ref[...] = mu + sigma * eps
    mu_ref[...] = mu
    lv_ref[...] = lv


# --------------------------------------------------------------------------- #
# Host-side wrapper: lane tiling, resident weights, pipelined pallas_call.
# --------------------------------------------------------------------------- #
@functools.partial(jax.jit, static_argnames=("tm",))
def vi_forward(x, eps, fused_params, *, tm=8192):
    """x, eps: (N, 1) float32.  Returns (z, mu, log_var), each (N, 1)."""
    n = x.shape[0]
    n128 = pl.cdiv(n, 128) * 128                # lane multiple
    tm = pl.cdiv(tm, 128) * 128                 # tile is a lane multiple
    tm = min(tm, n128)                          # tile never exceeds padded batch
    n_pad = pl.cdiv(n128, tm) * tm              # whole number of tiles
    grid = n_pad // tm
    pad = n_pad - n

    xr = jnp.pad(x.astype(jnp.float32).reshape(1, n), ((0, 0), (0, pad)))
    er = jnp.pad(eps.astype(jnp.float32).reshape(1, n), ((0, 0), (0, pad)))

    lane_spec = pl.BlockSpec((1, tm), lambda i: (0, i))

    def weight_spec(a):  # full array, VMEM-resident across all grid steps
        return pl.BlockSpec(a.shape, lambda i: (0, 0))

    in_specs = [lane_spec, lane_spec] + [weight_spec(p) for p in fused_params]
    out_sd = jax.ShapeDtypeStruct((1, n_pad), jnp.float32)

    z, mu, lv = pl.pallas_call(
        vi_kernel,
        grid=(grid,),
        in_specs=in_specs,
        out_specs=(lane_spec, lane_spec, lane_spec),
        out_shape=(out_sd, out_sd, out_sd),
        compiler_params=pltpu.CompilerParams(
            dimension_semantics=("parallel",)),
    )(xr, er, *fused_params)

    take = lambda a: a[0, :n].reshape(n, 1)
    return take(z), take(mu), take(lv)


# --------------------------------------------------------------------------- #
# Parameter init (PyTorch nn.Linear default) and branch fusion.
# --------------------------------------------------------------------------- #
def init_linear(key, fan_in, fan_out):
    kw, kb = jax.random.split(key)
    bound = 1.0 / (fan_in ** 0.5)
    w = jax.random.uniform(kw, (fan_in, fan_out), jnp.float32, -bound, bound)
    b = jax.random.uniform(kb, (fan_out,), jnp.float32, -bound, bound)
    return w, b


def init_vi_params(key):
    keys = jax.random.split(key, 6)
    dims = [(1, 20), (20, 10), (10, 1)]
    mu_params = [init_linear(keys[i], *dims[i]) for i in range(3)]
    lv_params = [init_linear(keys[3 + i], *dims[i]) for i in range(3)]
    return mu_params, lv_params


def fuse_params(mu_params, lv_params):
    """Fuse the two branches into one block-diagonal MLP, hidden on sublanes."""
    (w1m, b1m), (w2m, b2m), (w3m, b3m) = mu_params
    (w1v, b1v), (w2v, b2v), (w3v, b3v) = lv_params

    w1 = jnp.concatenate([w1m[0], w1v[0]])[:, None]                  # (40, 1)
    b1 = jnp.concatenate([b1m, b1v])[:, None]                        # (40, 1)

    w2 = jnp.zeros((20, 40), jnp.float32)
    w2 = w2.at[:10, :20].set(w2m.T).at[10:, 20:].set(w2v.T)          # (20, 40) block-diag
    b2 = jnp.concatenate([b2m, b2v])[:, None]                        # (20, 1)

    w3 = jnp.zeros((2, 20), jnp.float32)
    w3 = w3.at[0, :10].set(w3m[:, 0]).at[1, 10:].set(w3v[:, 0])      # (2, 20)
    b3 = jnp.stack([b3m, b3v]).reshape(2, 1)                         # (2, 1)
    return (w1, b1, w2, b2, w3, b3)


# Pure-JAX reference (unfused, unpadded) for correctness checking.
def vi_reference(x, eps, mu_params, lv_params):
    def mlp(h, params):
        (w1, b1), (w2, b2), (w3, b3) = params
        h = jnp.maximum(h @ w1 + b1, 0.0)
        h = jnp.maximum(h @ w2 + b2, 0.0)
        return h @ w3 + b3

    mu = mlp(x, mu_params)
    lv = mlp(x, lv_params)
    sigma = jnp.exp(0.5 * lv) + 1e-5
    return mu + sigma * eps, mu, lv


if __name__ == "__main__":
    key = jax.random.PRNGKey(0)
    k_params, k_x, k_eps = jax.random.split(key, 3)

    # Small batch, deliberately not a multiple of 128 -> exercises lane padding
    # and (with tm=128) the multi-block pipelined grid.
    N = 257
    x = jax.random.normal(k_x, (N, 1), jnp.float32)
    eps = jax.random.normal(k_eps, (N, 1), jnp.float32)   # torch.randn_like(sigma)

    mu_params, lv_params = init_vi_params(k_params)
    fused = fuse_params(mu_params, lv_params)

    z_ref, mu_ref, lv_ref = vi_reference(x, eps, mu_params, lv_params)

    # Multi-tile path (grid = 3 lane tiles of 128).
    z, mu, lv = vi_forward(x, eps, fused, tm=128)
    jax.block_until_ready((z, mu, lv))
    assert jnp.allclose(z, z_ref, atol=1e-4), "z mismatch vs reference (tm=128)"
    assert jnp.allclose(mu, mu_ref, atol=1e-4), "mu mismatch vs reference (tm=128)"
    assert jnp.allclose(lv, lv_ref, atol=1e-4), "log_var mismatch vs reference (tm=128)"

    # Default tile (single block for this small batch).
    z2, mu2, lv2 = vi_forward(x, eps, fused)
    jax.block_until_ready((z2, mu2, lv2))
    assert jnp.allclose(z2, z_ref, atol=1e-4), "z mismatch vs reference (default tm)"
    assert jnp.allclose(mu2, mu_ref, atol=1e-4), "mu mismatch vs reference (default tm)"
    assert jnp.allclose(lv2, lv_ref, atol=1e-4), "log_var mismatch vs reference (default tm)"

    print("KERNEL_OK")
</pallas_src>

<mosaic_0001>
module attributes {stable_mosaic.version = 11 : i64} {
  func.func @vi_kernel(%arg0: i32, %arg1: memref<1x128xf32, #tpu.memory_space<vmem>>, %arg2: memref<1x128xf32, #tpu.memory_space<vmem>>, %arg3: memref<40x1xf32, #tpu.memory_space<vmem>>, %arg4: memref<40x1xf32, #tpu.memory_space<vmem>>, %arg5: memref<20x40xf32, #tpu.memory_space<vmem>>, %arg6: memref<20x1xf32, #tpu.memory_space<vmem>>, %arg7: memref<2x20xf32, #tpu.memory_space<vmem>>, %arg8: memref<2x1xf32, #tpu.memory_space<vmem>>, %arg9: memref<1x128xf32, #tpu.memory_space<vmem>>, %arg10: memref<1x128xf32, #tpu.memory_space<vmem>>, %arg11: memref<1x128xf32, #tpu.memory_space<vmem>>) attributes {dimension_semantics = [#tpu.dimension_semantics<parallel>], iteration_bounds = array<i64: 3>, scalar_prefetch = 0 : i64, scratch_operands = 0 : i64, tpu.core_type = #tpu.core_type<tc>, window_params = [{transform_indices = @transform_0, window_bounds = array<i64: 1, 128>}, {transform_indices = @transform_1, window_bounds = array<i64: 1, 128>}, {pipeline_mode = #tpu.pipeline_mode<synchronous>, transform_indices = @transform_2, window_bounds = array<i64: 40, 1>}, {pipeline_mode = #tpu.pipeline_mode<synchronous>, transform_indices = @transform_3, window_bounds = array<i64: 40, 1>}, {pipeline_mode = #tpu.pipeline_mode<synchronous>, transform_indices = @transform_4, window_bounds = array<i64: 20, 40>}, {pipeline_mode = #tpu.pipeline_mode<synchronous>, transform_indices = @transform_5, window_bounds = array<i64: 20, 1>}, {pipeline_mode = #tpu.pipeline_mode<synchronous>, transform_indices = @transform_6, window_bounds = array<i64: 2, 20>}, {pipeline_mode = #tpu.pipeline_mode<synchronous>, transform_indices = @transform_7, window_bounds = array<i64: 2, 1>}, {transform_indices = @transform_8, window_bounds = array<i64: 1, 128>}, {transform_indices = @transform_9, window_bounds = array<i64: 1, 128>}, {transform_indices = @transform_10, window_bounds = array<i64: 1, 128>}]} {
    %c0 = arith.constant 0 : index
    %c0_0 = arith.constant 0 : index
    %0 = vector.load %arg1[%c0, %c0_0] : memref<1x128xf32, #tpu.memory_space<vmem>>, vector<1x128xf32>
    %c0_1 = arith.constant 0 : index
    %c0_2 = arith.constant 0 : index
    %1 = vector.load %arg2[%c0_1, %c0_2] : memref<1x128xf32, #tpu.memory_space<vmem>>, vector<1x128xf32>
    %c0_3 = arith.constant 0 : index
    %c0_4 = arith.constant 0 : index
    %2 = vector.load %arg3[%c0_3, %c0_4] : memref<40x1xf32, #tpu.memory_space<vmem>>, vector<40x1xf32>
    %3 = vector.broadcast %2 : vector<40x1xf32> to vector<40x128xf32>
    %4 = vector.broadcast %0 : vector<1x128xf32> to vector<40x128xf32>
    %5 = arith.mulf %3, %4 : vector<40x128xf32>
    %c0_5 = arith.constant 0 : index
    %c0_6 = arith.constant 0 : index
    %6 = vector.load %arg4[%c0_5, %c0_6] : memref<40x1xf32, #tpu.memory_space<vmem>>, vector<40x1xf32>
    %7 = vector.broadcast %6 : vector<40x1xf32> to vector<40x128xf32>
    %8 = arith.addf %5, %7 : vector<40x128xf32>
    %cst = arith.constant 0.000000e+00 : f32
    %9 = vector.broadcast %cst : f32 to vector<40x128xf32>
    %10 = arith.maximumf %8, %9 : vector<40x128xf32>
    %c0_7 = arith.constant 0 : index
    %c0_8 = arith.constant 0 : index
    %11 = vector.load %arg5[%c0_7, %c0_8] : memref<20x40xf32, #tpu.memory_space<vmem>>, vector<20x40xf32>
    %cst_9 = arith.constant dense<0.000000e+00> : vector<20x128xf32>
    %12 = tpu.matmul %11, %10, %cst_9 {dimension_numbers = #tpu.dot_dimension_numbers<[1], [0], [0], [1], [0, 0, 1, 1], [], []>} : vector<20x40xf32>, vector<40x128xf32>, vector<20x128xf32> -> vector<20x128xf32>
    %c0_10 = arith.constant 0 : index
    %c0_11 = arith.constant 0 : index
    %13 = vector.load %arg6[%c0_10, %c0_11] : memref<20x1xf32, #tpu.memory_space<vmem>>, vector<20x1xf32>
    %14 = vector.broadcast %13 : vector<20x1xf32> to vector<20x128xf32>
    %15 = arith.addf %12, %14 : vector<20x128xf32>
    %cst_12 = arith.constant 0.000000e+00 : f32
    %16 = vector.broadcast %cst_12 : f32 to vector<20x128xf32>
    %17 = arith.maximumf %15, %16 : vector<20x128xf32>
    %c0_13 = arith.constant 0 : index
    %c0_14 = arith.constant 0 : index
    %18 = vector.load %arg7[%c0_13, %c0_14] : memref<2x20xf32, #tpu.memory_space<vmem>>, vector<2x20xf32>
    %cst_15 = arith.constant dense<0.000000e+00> : vector<2x128xf32>
    %19 = tpu.matmul %18, %17, %cst_15 {dimension_numbers = #tpu.dot_dimension_numbers<[1], [0], [0], [1], [0, 0, 1, 1], [], []>} : vector<2x20xf32>, vector<20x128xf32>, vector<2x128xf32> -> vector<2x128xf32>
    %c0_16 = arith.constant 0 : index
    %c0_17 = arith.constant 0 : index
    %20 = vector.load %arg8[%c0_16, %c0_17] : memref<2x1xf32, #tpu.memory_space<vmem>>, vector<2x1xf32>
    %21 = vector.broadcast %20 : vector<2x1xf32> to vector<2x128xf32>
    %22 = arith.addf %19, %21 : vector<2x128xf32>
    %23 = vector.extract_strided_slice %22 {offsets = [0, 0], sizes = [1, 128], strides = [1, 1]} : vector<2x128xf32> to vector<1x128xf32>
    %24 = vector.extract_strided_slice %22 {offsets = [1, 0], sizes = [1, 128], strides = [1, 1]} : vector<2x128xf32> to vector<1x128xf32>
    %cst_18 = arith.constant 5.000000e-01 : f32
    %25 = vector.broadcast %cst_18 : f32 to vector<1x128xf32>
    %26 = arith.mulf %25, %24 : vector<1x128xf32>
    %27 = math.exp %26 : vector<1x128xf32>
    %cst_19 = arith.constant 9.99999974E-6 : f32
    %28 = vector.broadcast %cst_19 : f32 to vector<1x128xf32>
    %29 = arith.addf %27, %28 : vector<1x128xf32>
    %30 = arith.mulf %29, %1 : vector<1x128xf32>
    %31 = arith.addf %23, %30 : vector<1x128xf32>
    %c0_20 = arith.constant 0 : index
    %c0_21 = arith.constant 0 : index
    %32 = vector.load %arg9[%c0_20, %c0_21] : memref<1x128xf32, #tpu.memory_space<vmem>>, vector<1x128xf32>
    tpu.vector_store %arg9[%c0_20, %c0_21], %31 {strides = array<i32>} : memref<1x128xf32, #tpu.memory_space<vmem>>, vector<1x128xf32>,
    %c0_22 = arith.constant 0 : index
    %c0_23 = arith.constant 0 : index
    %33 = vector.load %arg10[%c0_22, %c0_23] : memref<1x128xf32, #tpu.memory_space<vmem>>, vector<1x128xf32>
    tpu.vector_store %arg10[%c0_22, %c0_23], %23 {strides = array<i32>} : memref<1x128xf32, #tpu.memory_space<vmem>>, vector<1x128xf32>,
    %c0_24 = arith.constant 0 : index
    %c0_25 = arith.constant 0 : index
    %34 = vector.load %arg11[%c0_24, %c0_25] : memref<1x128xf32, #tpu.memory_space<vmem>>, vector<1x128xf32>
    tpu.vector_store %arg11[%c0_24, %c0_25], %24 {strides = array<i32>} : memref<1x128xf32, #tpu.memory_space<vmem>>, vector<1x128xf32>,
    return
  }
  func.func @transform_0(%arg0: i32) -> (i32, i32) {
    %c0_i32 = arith.constant 0 : i32
    %c0_i32_0 = arith.constant 0 : i32
    return %c0_i32, %arg0 : i32, i32
  }
  func.func @transform_1(%arg0: i32) -> (i32, i32) {
    %c0_i32 = arith.constant 0 : i32
    %c0_i32_0 = arith.constant 0 : i32
    return %c0_i32, %arg0 : i32, i32
  }
  func.func @transform_2(%arg0: i32) -> (i32, i32) {
    %c0_i32 = arith.constant 0 : i32
    %c0_i32_0 = arith.constant 0 : i32
    %c0_i32_1 = arith.constant 0 : i32
    return %c0_i32, %c0_i32_0 : i32, i32
  }
  func.func @transform_3(%arg0: i32) -> (i32, i32) {
    %c0_i32 = arith.constant 0 : i32
    %c0_i32_0 = arith.constant 0 : i32
    %c0_i32_1 = arith.constant 0 : i32
    return %c0_i32, %c0_i32_0 : i32, i32
  }
  func.func @transform_4(%arg0: i32) -> (i32, i32) {
    %c0_i32 = arith.constant 0 : i32
    %c0_i32_0 = arith.constant 0 : i32
    %c0_i32_1 = arith.constant 0 : i32
    return %c0_i32, %c0_i32_0 : i32, i32
  }
  func.func @transform_5(%arg0: i32) -> (i32, i32) {
    %c0_i32 = arith.constant 0 : i32
    %c0_i32_0 = arith.constant 0 : i32
    %c0_i32_1 = arith.constant 0 : i32
    return %c0_i32, %c0_i32_0 : i32, i32
  }
  func.func @transform_6(%arg0: i32) -> (i32, i32) {
    %c0_i32 = arith.constant 0 : i32
    %c0_i32_0 = arith.constant 0 : i32
    %c0_i32_1 = arith.constant 0 : i32
    return %c0_i32, %c0_i32_0 : i32, i32
  }
  func.func @transform_7(%arg0: i32) -> (i32, i32) {
    %c0_i32 = arith.constant 0 : i32
    %c0_i32_0 = arith.constant 0 : i32
    %c0_i32_1 = arith.constant 0 : i32
    return %c0_i32, %c0_i32_0 : i32, i32
  }
  func.func @transform_8(%arg0: i32) -> (i32, i32) {
    %c0_i32 = arith.constant 0 : i32
    %c0_i32_0 = arith.constant 0 : i32
    return %c0_i32, %arg0 : i32, i32
  }
  func.func @transform_9(%arg0: i32) -> (i32, i32) {
    %c0_i32 = arith.constant 0 : i32
    %c0_i32_0 = arith.constant 0 : i32
    return %c0_i32, %arg0 : i32, i32
  }
  func.func @transform_10(%arg0: i32) -> (i32, i32) {
    %c0_i32 = arith.constant 0 : i32
    %c0_i32_0 = arith.constant 0 : i32
    return %c0_i32, %arg0 : i32, i32
  }
}

</mosaic_0001>

<llo_original>
// kernel: vi_forward.1
$region0: #{vi_forward.1}
  #allocation0 [shape = 'u32[]', space=smem, size = 0x4, offset = 0x4, fixed_abs, tag = 'smem constant byte address 0x4 - core index']
  #allocation1 [shape = 'u32[144,128]{1,0:T(1,128)}', space=vmem, size = 0x12000, scoped, tag = 'internal scratch']
  %s0 = inlined_call_operand.vmem [shape: f32[1,384], index: 0, kind: input, shape index: {}]
  %s1 = inlined_call_operand.vmem [shape: f32[1,384], index: 1, kind: input, shape index: {}]
  %s2 = inlined_call_operand.vmem [shape: f32[40,1], index: 2, kind: input, shape index: {}]
  %s3 = inlined_call_operand.vmem [shape: f32[40,1], index: 3, kind: input, shape index: {}]
  %s4 = inlined_call_operand.vmem [shape: f32[20,40], index: 4, kind: input, shape index: {}]
  %s5 = inlined_call_operand.vmem [shape: f32[20,1], index: 5, kind: input, shape index: {}]
  %s6 = inlined_call_operand.vmem [shape: f32[2,20], index: 6, kind: input, shape index: {}]
  %s7 = inlined_call_operand.vmem [shape: f32[2,1], index: 7, kind: input, shape index: {}]
  %s8 = inlined_call_operand.vmem [shape: f32[1,384], index: 8, kind: output, shape index: {0}]
  %s9 = inlined_call_operand.vmem [shape: f32[1,384], index: 9, kind: output, shape index: {1}]
  %s10 = inlined_call_operand.vmem [shape: f32[1,384], index: 10, kind: output, shape index: {2}]
  %11 = xla_tuple %s8, %s9, %s10
  %s12 = sld [smem:[#allocation0]]
  $region81: #{vi_forward.1} parent=0
    _
  %s14 = ssub.s32 1, %s12
  %s15 = scalar_select 0, %s14, %s12
  loop: start=0, step=1, limit=5
  $region2: #{vi_forward.1} parent=0 // loop_pre_header
    _
  $region3: #{vi_forward.1} parent=0 // loop_header
    %s17 = sphi 0, %s21
    %p18 = scmp.ge.s32.totalorder %s17, 5
    %s27 = sphi 0, %s29
    %s30 = sphi 0, %s27
    %s31 = sphi 0, %s30
    %s47 = sphi 0, %s31
    %s53 = sphi 0, %s55
    %s56 = sphi 0, %s53
    %s57 = sphi 0, %s56
    %s73 = sphi 0, %s57
    %s77 = sphi 0, %s77
    %s79 = sphi 0, %s77
    %s80 = sphi 0, %s79
    %s94 = sphi 0, %s80
    %s98 = sphi 0, %s98
    %s100 = sphi 0, %s98
    %s101 = sphi 0, %s100
    %s115 = sphi 0, %s101
    %s119 = sphi 0, %s119
    %s121 = sphi 0, %s119
    %s122 = sphi 0, %s121
    %s136 = sphi 0, %s122
    %s140 = sphi 0, %s140
    %s142 = sphi 0, %s140
    %s143 = sphi 0, %s142
    %s157 = sphi 0, %s143
    %s161 = sphi 0, %s161
    %s163 = sphi 0, %s161
    %s164 = sphi 0, %s163
    %s178 = sphi 0, %s164
    %s182 = sphi 0, %s182
    %s184 = sphi 0, %s182
    %s185 = sphi 0, %s184
    %s199 = sphi 0, %s185
    %s205 = sphi 0, %s207
    %s208 = sphi 0, %s205
    %s209 = sphi 0, %s208
    %s225 = sphi 0, %s209
    %s231 = sphi 0, %s233
    %s234 = sphi 0, %s231
    %s235 = sphi 0, %s234
    %s251 = sphi 0, %s235
    %s257 = sphi 0, %s259
    %s260 = sphi 0, %s257
    %s261 = sphi 0, %s260
    %s277 = sphi 0, %s261
  $region4: #{vi_forward.1} parent=0 // loop_header_branch
    %20 = sbr.rel (%p18) target = $region8
  $region5: #{vi_forward.1} parent=0 // loop_body
    %s22 = ssub.s32 %s17, 1
    %s23 = ssub.s32 %s17, 2
    %s24 = sadd.s32 %s17, 1
    %s25 = ssub.s32 %s17, %s24
    %p26 = scmp.eq.s32.totalorder %s25, 0
    %s28 = sadd.s32 %s27, 1
    %s29 = scalar_select %p26, %s27, %s28
    %p32 = pneg %p26
    %p33 = scmp.eq.s32.totalorder %s17, 2
    %p34 = por %p32, %p33
    %p35 = scmp.ne.s32.totalorder %s27, %s30
    %p36 = scmp.eq.s32.totalorder %s17, 0
    %p37 = por %p35, %p36
    %p38 = scmp.ne.s32.totalorder %s27, %s30
    %p39 = scmp.eq.s32.totalorder %s22, 2
    %p40 = por %p38, %p39
    %p41 = scmp.ne.s32.totalorder %s30, %s31
    %p42 = scmp.eq.s32.totalorder %s22, 0
    %p43 = por %p41, %p42
    %p44 = scmp.ne.s32.totalorder %s30, %s31
    %p45 = scmp.eq.s32.totalorder %s23, 2
    %p46 = por %p44, %p45
    %p48 = scmp.ne.s32.totalorder %s31, %s47
    %p49 = scmp.eq.s32.totalorder %s23, 0
    %p50 = por %p48, %p49
    %s51 = ssub.s32 %s17, %s24
    %p52 = scmp.eq.s32.totalorder %s51, 0
    %s54 = sadd.s32 %s53, 1
    %s55 = scalar_select %p52, %s53, %s54
    %p58 = pneg %p52
    %p59 = scmp.eq.s32.totalorder %s17, 2
    %p60 = por %p58, %p59
    %p61 = scmp.ne.s32.totalorder %s53, %s56
    %p62 = scmp.eq.s32.totalorder %s17, 0
    %p63 = por %p61, %p62
    %p64 = scmp.ne.s32.totalorder %s53, %s56
    %p65 = scmp.eq.s32.totalorder %s22, 2
    %p66 = por %p64, %p65
    %p67 = scmp.ne.s32.totalorder %s56, %s57
    %p68 = scmp.eq.s32.totalorder %s22, 0
    %p69 = por %p67, %p68
    %p70 = scmp.ne.s32.totalorder %s56, %s57
    %p71 = scmp.eq.s32.totalorder %s23, 2
    %p72 = por %p70, %p71
    %p74 = scmp.ne.s32.totalorder %s57, %s73
    %p75 = scmp.eq.s32.totalorder %s23, 0
    %p76 = por %p74, %p75
    %s78 = sadd.s32 %s77, 1
    %p81 = scmp.eq.s32.totalorder %s17, 2
    %p82 = scmp.ne.s32.totalorder %s77, %s79
    %p83 = scmp.eq.s32.totalorder %s17, 0
    %p84 = por %p82, %p83
    %p85 = scmp.ne.s32.totalorder %s77, %s79
    %p86 = scmp.eq.s32.totalorder %s22, 2
    %p87 = por %p85, %p86
    %p88 = scmp.ne.s32.totalorder %s79, %s80
    %p89 = scmp.eq.s32.totalorder %s22, 0
    %p90 = por %p88, %p89
    %p91 = scmp.ne.s32.totalorder %s79, %s80
    %p92 = scmp.eq.s32.totalorder %s23, 2
    %p93 = por %p91, %p92
    %p95 = scmp.ne.s32.totalorder %s80, %s94
    %p96 = scmp.eq.s32.totalorder %s23, 0
    %p97 = por %p95, %p96
    %s99 = sadd.s32 %s98, 1
    %p102 = scmp.eq.s32.totalorder %s17, 2
    %p103 = scmp.ne.s32.totalorder %s98, %s100
    %p104 = scmp.eq.s32.totalorder %s17, 0
    %p105 = por %p103, %p104
    %p106 = scmp.ne.s32.totalorder %s98, %s100
    %p107 = scmp.eq.s32.totalorder %s22, 2
    %p108 = por %p106, %p107
    %p109 = scmp.ne.s32.totalorder %s100, %s101
    %p110 = scmp.eq.s32.totalorder %s22, 0
    %p111 = por %p109, %p110
    %p112 = scmp.ne.s32.totalorder %s100, %s101
    %p113 = scmp.eq.s32.totalorder %s23, 2
    %p114 = por %p112, %p113
    %p116 = scmp.ne.s32.totalorder %s101, %s115
    %p117 = scmp.eq.s32.totalorder %s23, 0
    %p118 = por %p116, %p117
    %s120 = sadd.s32 %s119, 1
    %p123 = scmp.eq.s32.totalorder %s17, 2
    %p124 = scmp.ne.s32.totalorder %s119, %s121
    %p125 = scmp.eq.s32.totalorder %s17, 0
    %p126 = por %p124, %p125
    %p127 = scmp.ne.s32.totalorder %s119, %s121
    %p128 = scmp.eq.s32.totalorder %s22, 2
    %p129 = por %p127, %p128
    %p130 = scmp.ne.s32.totalorder %s121, %s122
    %p131 = scmp.eq.s32.totalorder %s22, 0
    %p132 = por %p130, %p131
    %p133 = scmp.ne.s32.totalorder %s121, %s122
    %p134 = scmp.eq.s32.totalorder %s23, 2
    %p135 = por %p133, %p134
    %p137 = scmp.ne.s32.totalorder %s122, %s136
    %p138 = scmp.eq.s32.totalorder %s23, 0
    %p139 = por %p137, %p138
    %s141 = sadd.s32 %s140, 1
    %p144 = scmp.eq.s32.totalorder %s17, 2
    %p145 = scmp.ne.s32.totalorder %s140, %s142
    %p146 = scmp.eq.s32.totalorder %s17, 0
    %p147 = por %p145, %p146
    %p148 = scmp.ne.s32.totalorder %s140, %s142
    %p149 = scmp.eq.s32.totalorder %s22, 2
    %p150 = por %p148, %p149
    %p151 = scmp.ne.s32.totalorder %s142, %s143
    %p152 = scmp.eq.s32.totalorder %s22, 0
    %p153 = por %p151, %p152
    %p154 = scmp.ne.s32.totalorder %s142, %s143
    %p155 = scmp.eq.s32.totalorder %s23, 2
    %p156 = por %p154, %p155
    %p158 = scmp.ne.s32.totalorder %s143, %s157
    %p159 = scmp.eq.s32.totalorder %s23, 0
    %p160 = por %p158, %p159
    %s162 = sadd.s32 %s161, 1
    %p165 = scmp.eq.s32.totalorder %s17, 2
    %p166 = scmp.ne.s32.totalorder %s161, %s163
    %p167 = scmp.eq.s32.totalorder %s17, 0
    %p168 = por %p166, %p167
    %p169 = scmp.ne.s32.totalorder %s161, %s163
    %p170 = scmp.eq.s32.totalorder %s22, 2
    %p171 = por %p169, %p170
    %p172 = scmp.ne.s32.totalorder %s163, %s164
    %p173 = scmp.eq.s32.totalorder %s22, 0
    %p174 = por %p172, %p173
    %p175 = scmp.ne.s32.totalorder %s163, %s164
    %p176 = scmp.eq.s32.totalorder %s23, 2
    %p177 = por %p175, %p176
    %p179 = scmp.ne.s32.totalorder %s164, %s178
    %p180 = scmp.eq.s32.totalorder %s23, 0
    %p181 = por %p179, %p180
    %s183 = sadd.s32 %s182, 1
    %p186 = scmp.eq.s32.totalorder %s17, 2
    %p187 = scmp.ne.s32.totalorder %s182, %s184
    %p188 = scmp.eq.s32.totalorder %s17, 0
    %p189 = por %p187, %p188
    %p190 = scmp.ne.s32.totalorder %s182, %s184
    %p191 = scmp.eq.s32.totalorder %s22, 2
    %p192 = por %p190, %p191
    %p193 = scmp.ne.s32.totalorder %s184, %s185
    %p194 = scmp.eq.s32.totalorder %s22, 0
    %p195 = por %p193, %p194
    %p196 = scmp.ne.s32.totalorder %s184, %s185
    %p197 = scmp.eq.s32.totalorder %s23, 2
    %p198 = por %p196, %p197
    %p200 = scmp.ne.s32.totalorder %s185, %s199
    %p201 = scmp.eq.s32.totalorder %s23, 0
    %p202 = por %p200, %p201
    %s203 = ssub.s32 %s17, %s24
    %p204 = scmp.eq.s32.totalorder %s203, 0
    %s206 = sadd.s32 %s205, 1
    %s207 = scalar_select %p204, %s205, %s206
    %p210 = pneg %p204
    %p211 = scmp.eq.s32.totalorder %s17, 2
    %p212 = por %p210, %p211
    %p213 = scmp.ne.s32.totalorder %s205, %s208
    %p214 = scmp.eq.s32.totalorder %s17, 0
    %p215 = por %p213, %p214
    %p216 = scmp.ne.s32.totalorder %s205, %s208
    %p217 = scmp.eq.s32.totalorder %s22, 2
    %p218 = por %p216, %p217
    %p219 = scmp.ne.s32.totalorder %s208, %s209
    %p220 = scmp.eq.s32.totalorder %s22, 0
    %p221 = por %p219, %p220
    %p222 = scmp.ne.s32.totalorder %s208, %s209
    %p223 = scmp.eq.s32.totalorder %s23, 2
    %p224 = por %p222, %p223
    %p226 = scmp.ne.s32.totalorder %s209, %s225
    %p227 = scmp.eq.s32.totalorder %s23, 0
    %p228 = por %p226, %p227
    %s229 = ssub.s32 %s17, %s24
    %p230 = scmp.eq.s32.totalorder %s229, 0
    %s232 = sadd.s32 %s231, 1
    %s233 = scalar_select %p230, %s231, %s232
    %p236 = pneg %p230
    %p237 = scmp.eq.s32.totalorder %s17, 2
    %p238 = por %p236, %p237
    %p239 = scmp.ne.s32.totalorder %s231, %s234
    %p240 = scmp.eq.s32.totalorder %s17, 0
    %p241 = por %p239, %p240
    %p242 = scmp.ne.s32.totalorder %s231, %s234
    %p243 = scmp.eq.s32.totalorder %s22, 2
    %p244 = por %p242, %p243
    %p245 = scmp.ne.s32.totalorder %s234, %s235
    %p246 = scmp.eq.s32.totalorder %s22, 0
    %p247 = por %p245, %p246
    %p248 = scmp.ne.s32.totalorder %s234, %s235
    %p249 = scmp.eq.s32.totalorder %s23, 2
    %p250 = por %p248, %p249
    %p252 = scmp.ne.s32.totalorder %s235, %s251
    %p253 = scmp.eq.s32.totalorder %s23, 0
    %p254 = por %p252, %p253
    %s255 = ssub.s32 %s17, %s24
    %p256 = scmp.eq.s32.totalorder %s255, 0
    %s258 = sadd.s32 %s257, 1
    %s259 = scalar_select %p256, %s257, %s258
    %p262 = pneg %p256
    %p263 = scmp.eq.s32.totalorder %s17, 2
    %p264 = por %p262, %p263
    %p265 = scmp.ne.s32.totalorder %s257, %s260
    %p266 = scmp.eq.s32.totalorder %s17, 0
    %p267 = por %p265, %p266
    %p268 = scmp.ne.s32.totalorder %s257, %s260
    %p269 = scmp.eq.s32.totalorder %s22, 2
    %p270 = por %p268, %p269
    %p271 = scmp.ne.s32.totalorder %s260, %s261
    %p272 = scmp.eq.s32.totalorder %s22, 0
    %p273 = por %p271, %p272
    %p274 = scmp.ne.s32.totalorder %s260, %s261
    %p275 = scmp.eq.s32.totalorder %s23, 2
    %p276 = por %p274, %p275
    %p278 = scmp.ne.s32.totalorder %s261, %s277
    %p279 = scmp.eq.s32.totalorder %s23, 0
    %p280 = por %p278, %p279
    %p281 = scmp.le.s32.totalorder 1, %s17
    %p282 = scmp.lt.s32.totalorder %s17, 4
    %p283 = pnand %p281, %p282
    %p284 = pneg %p283
    // Predicated region
    $region9: #{vi_forward.1} parent=5 // pred_check
      _
    $region10: #{vi_forward.1} parent=5 // pred_check_branch
      %286 = sbr.rel (%p283) target = $region12
    $region11: #{vi_forward.1} parent=5 // pred_region
      %s287 = ssub.s32 %s17, 1
      // Predicated region
      $region13: #{vi_forward.1} parent=11 // pred_check
        %p288 = pneg %p90
      $region14: #{vi_forward.1} parent=11 // pred_check_branch
        %290 = sbr.rel (%p288) target = $region16
      $region15: #{vi_forward.1} parent=11 // pred_region
        _
      $region16: #{vi_forward.1} parent=11 // pred_fallthru
        _
      // Predicated region
      $region17: #{vi_forward.1} parent=11 // pred_check
        %p291 = pneg %p111
      $region18: #{vi_forward.1} parent=11 // pred_check_branch
        %293 = sbr.rel (%p291) target = $region20
      $region19: #{vi_forward.1} parent=11 // pred_region
        _
      $region20: #{vi_forward.1} parent=11 // pred_fallthru
        _
      // Predicated region
      $region21: #{vi_forward.1} parent=11 // pred_check
        %p294 = pneg %p132
      $region22: #{vi_forward.1} parent=11 // pred_check_branch
        %296 = sbr.rel (%p294) target = $region24
      $region23: #{vi_forward.1} parent=11 // pred_region
        _
      $region24: #{vi_forward.1} parent=11 // pred_fallthru
        _
      // Predicated region
      $region25: #{vi_forward.1} parent=11 // pred_check
        %p297 = pneg %p153
      $region26: #{vi_forward.1} parent=11 // pred_check_branch
        %299 = sbr.rel (%p297) target = $region28
      $region27: #{vi_forward.1} parent=11 // pred_region
        _
      $region28: #{vi_forward.1} parent=11 // pred_fallthru
        _
      // Predicated region
      $region29: #{vi_forward.1} parent=11 // pred_check
        %p300 = pneg %p174
      $region30: #{vi_forward.1} parent=11 // pred_check_branch
        %302 = sbr.rel (%p300) target = $region32
      $region31: #{vi_forward.1} parent=11 // pred_region
        _
      $region32: #{vi_forward.1} parent=11 // pred_fallthru
        _
      // Predicated region
      $region33: #{vi_forward.1} parent=11 // pred_check
        %p303 = pneg %p195
      $region34: #{vi_forward.1} parent=11 // pred_check_branch
        %305 = sbr.rel (%p303) target = $region36
      $region35: #{vi_forward.1} parent=11 // pred_region
        _
      $region36: #{vi_forward.1} parent=11 // pred_fallthru
        _
    $region12: #{vi_forward.1} parent=5 // pred_fallthru
      _
    %p306 = scmp.lt.s32.totalorder %s17, 3
    // Predicated region
    $region37: #{vi_forward.1} parent=5 // pred_check
      %p307 = pneg %p306
    $region38: #{vi_forward.1} parent=5 // pred_check_branch
      %309 = sbr.rel (%p307) target = $region40
    $region39: #{vi_forward.1} parent=5 // pred_region
      // Predicated region
      $region41: #{vi_forward.1} parent=39 // pred_check
        %p310 = pneg %p37
      $region42: #{vi_forward.1} parent=39 // pred_check_branch
        %312 = sbr.rel (%p310) target = $region44
      $region43: #{vi_forward.1} parent=39 // pred_region
        %p313 = scmp.lt.s32.totalorder %s17, 2
        %s314 = scalar_select %p313, %s17, 2
        %s315 = scalar_lea.vmem %s0, %s314
      $region44: #{vi_forward.1} parent=39 // pred_fallthru
        _
      // Predicated region
      $region45: #{vi_forward.1} parent=39 // pred_check
        %p316 = pneg %p63
      $region46: #{vi_forward.1} parent=39 // pred_check_branch
        %318 = sbr.rel (%p316) target = $region48
      $region47: #{vi_forward.1} parent=39 // pred_region
        %p319 = scmp.lt.s32.totalorder %s17, 2
        %s320 = scalar_select %p319, %s17, 2
        %s321 = scalar_lea.vmem %s1, %s320
      $region48: #{vi_forward.1} parent=39 // pred_fallthru
        _
    $region40: #{vi_forward.1} parent=5 // pred_fallthru
      _
    %p322 = scmp.le.s32.totalorder 1, %s17
    %p323 = scmp.lt.s32.totalorder %s17, 4
    %p324 = pnand %p322, %p323
    %p325 = pneg %p324
    // Predicated region
    $region49: #{vi_forward.1} parent=5 // pred_check
      _
    $region50: #{vi_forward.1} parent=5 // pred_check_branch
      %327 = sbr.rel (%p324) target = $region52
    $region51: #{vi_forward.1} parent=5 // pred_region
      %s328 = ssub.s32 %s17, 1
      %p329 = scmp.lt.s32.totalorder %s22, 2
      %s330 = scalar_select %p329, %s22, 2
      %s331 = scalar_lea.vmem %s0, %s330
      %p332 = pneg %p43
      %p333 = pneg %p40
      %p334 = scmp.lt.s32.totalorder %s22, 2
      %s335 = scalar_select %p334, %s22, 2
      %s336 = scalar_lea.vmem %s1, %s335
      %p337 = pneg %p69
      %p338 = pneg %p66
      %p339 = pneg %p90
      %p340 = pneg %p87
      %p341 = pneg %p111
      %p342 = pneg %p108
      %p343 = pneg %p132
      %p344 = pneg %p129
      %p345 = pneg %p153
      %p346 = pneg %p150
      %p347 = pneg %p174
      %p348 = pneg %p171
      %p349 = pneg %p195
      %p350 = pneg %p192
      %p351 = pneg %p221
      %p352 = pneg %p218
      %p353 = scmp.lt.s32.totalorder %s22, 2
      %s354 = scalar_select %p353, %s22, 2
      %s355 = scalar_lea.vmem %s8, %s354
      %p356 = pneg %p247
      %p357 = pneg %p244
      %p358 = scmp.lt.s32.totalorder %s22, 2
      %s359 = scalar_select %p358, %s22, 2
      %s360 = scalar_lea.vmem %s9, %s359
      %p361 = pneg %p273
      %p362 = pneg %p270
      %p363 = scmp.lt.s32.totalorder %s22, 2
      %s364 = scalar_select %p363, %s22, 2
      %s365 = scalar_lea.vmem %s10, %s364
      %p366 = scmp.lt.s32.totalorder %s22, 2
      %s367 = scalar_select %p366, %s22, 2
      %s368 = scalar_lea.vmem %s0, %s367
      %p369 = scmp.lt.s32.totalorder %s22, 2
      %s370 = scalar_select %p369, %s22, 2
      %s371 = scalar_lea.vmem %s1, %s370
      %p372 = scmp.lt.s32.totalorder %s22, 2
      %s373 = scalar_select %p372, %s22, 2
      %s374 = scalar_lea.vmem %s8, %s373
      %p375 = scmp.lt.s32.totalorder %s22, 2
      %s376 = scalar_select %p375, %s22, 2
      %s377 = scalar_lea.vmem %s9, %s376
      %p378 = scmp.lt.s32.totalorder %s22, 2
      %s379 = scalar_select %p378, %s22, 2
      %s380 = scalar_lea.vmem %s10, %s379
      %v381 = vld [vmem:[%s368] sm:$0x1]
      %v382 = vld [vmem:[%s371] sm:$0x1]
      %v383 = vld [vmem:[%s2] sm:$0xff]
      %v384 = vld [vmem:[%s2 + $0x8] sm:$0xff]
      %v385 = vld [vmem:[%s2 + $0x10] sm:$0xff]
      %v386 = vld [vmem:[%s2 + $0x18] sm:$0xff]
      %v387 = vld [vmem:[%s2 + $0x20] sm:$0xff]
      %389 = vset.pattern.permute.xlu0 0
      %390 = vperm.xlu0 %389, %v383
      %v391 = vpop.permute.xlu0 %390
      %394 = vset.pattern.permute.xlu0 0
      %395 = vperm.xlu0 %394, %v384
      %v396 = vpop.permute.xlu0 %395
      %399 = vset.pattern.permute.xlu0 0
      %400 = vperm.xlu0 %399, %v385
      %v401 = vpop.permute.xlu0 %400
      %404 = vset.pattern.permute.xlu0 0
      %405 = vperm.xlu0 %404, %v386
      %v406 = vpop.permute.xlu0 %405
      %409 = vset.pattern.permute.xlu0 0
      %410 = vperm.xlu0 %409, %v387
      %v411 = vpop.permute.xlu0 %410
      %v414 = vlaneseq
      %v415 = vshrl.u32 %v414, 7
      %v416 = vsub.s32 0, %v415
      %v417 = vrot.slane %v381, %v416
      %v419 = vmul.f32 %v391, %v417
      %v420 = vmul.f32 %v396, %v417
      %v421 = vmul.f32 %v401, %v417
      %v422 = vmul.f32 %v406, %v417
      %v423 = vmul.f32 %v411, %v417
      %v424 = vld [vmem:[%s3] sm:$0xff]
      %v425 = vld [vmem:[%s3 + $0x8] sm:$0xff]
      %v426 = vld [vmem:[%s3 + $0x10] sm:$0xff]
      %v427 = vld [vmem:[%s3 + $0x18] sm:$0xff]
      %v428 = vld [vmem:[%s3 + $0x20] sm:$0xff]
      %430 = vset.pattern.permute.xlu0 0
      %431 = vperm.xlu0 %430, %v424
      %v432 = vpop.permute.xlu0 %431
      %435 = vset.pattern.permute.xlu0 0
      %436 = vperm.xlu0 %435, %v425
      %v437 = vpop.permute.xlu0 %436
      %440 = vset.pattern.permute.xlu0 0
      %441 = vperm.xlu0 %440, %v426
      %v442 = vpop.permute.xlu0 %441
      %445 = vset.pattern.permute.xlu0 0
      %446 = vperm.xlu0 %445, %v427
      %v447 = vpop.permute.xlu0 %446
      %450 = vset.pattern.permute.xlu0 0
      %451 = vperm.xlu0 %450, %v428
      %v452 = vpop.permute.xlu0 %451
      %v454 = vadd.f32 %v419, %v432
      %v455 = vadd.f32 %v420, %v437
      %v456 = vadd.f32 %v421, %v442
      %v457 = vadd.f32 %v422, %v447
      %v458 = vadd.f32 %v423, %v452
      %v459 = vmax.f32 %v454, 0.0
      %v460 = vmax.f32 %v455, 0.0
      %v461 = vmax.f32 %v456, 0.0
      %v462 = vmax.f32 %v457, 0.0
      %v463 = vmax.f32 %v458, 0.0
      %v464 = vld [vmem:[%s4] sm:$0xff]
      %v465 = vld [vmem:[%s4 + $0x8] sm:$0xff]
      %v466 = vld [vmem:[%s4 + $0x10] sm:$0xf]
      %v467 = vld [vmem:[%s5] sm:$0xff]
      %v468 = vld [vmem:[%s5 + $0x8] sm:$0xff]
      %v469 = vld [vmem:[%s5 + $0x10] sm:$0xf]
      %471 = vset.pattern.permute.xlu0 0
      %472 = vperm.xlu0 %471, %v467
      %v473 = vpop.permute.xlu0 %472
      %476 = vset.pattern.permute.xlu0 0
      %477 = vperm.xlu0 %476, %v468
      %v478 = vpop.permute.xlu0 %477
      %481 = vset.pattern.permute.xlu0 0
      %482 = vperm.xlu0 %481, %v469
      %v483 = vpop.permute.xlu0 %482
      %vm485 = vcmask 326656
      %v487 = vsel %vm485, %v464, 0
      %v490 = vsel %vm485, %v465, 0
      %v493 = vsel %vm485, %v466, 0
      %495 = vmatprep.subr.mxu0 0.0
      %496 = vmatpush1.msra.mxu0 0.0
      %497 = vmatprep.subr.mxu0 0.0
      %498 = vmatpush1.msra.mxu0 0.0
      %499 = vmatprep.subr.mxu0 0.0
      %500 = vmatpush1.msra.mxu0 0.0
      %501 = vmatprep.subr.mxu0 0.0
      %502 = vmatpush1.msra.mxu0 0.0
      %503 = vmatprep.subr.mxu0 0.0
      %504 = vmatpush1.msra.mxu0 0.0
      %505 = vmatprep.subr.mxu0 0.0
      %506 = vmatpush1.msra.mxu0 0.0
      %507 = vmatprep.subr.mxu0 0.0
      %508 = vmatpush1.msra.mxu0 0.0
      %509 = vmatprep.subr.mxu0 0.0
      %510 = vmatpush1.msra.mxu0 0.0
      %511 = vmatprep.subr.mxu0 0.0
      %512 = vmatpush1.msra.mxu0 0.0
      %513 = vmatprep.subr.mxu0 0.0
      %514 = vmatpush1.msra.mxu0 0.0
      %515 = vmatprep.subr.mxu0 0.0
      %516 = vmatpush1.msra.mxu0 0.0
      %517 = vmatprep.subr.mxu0 0.0
      %518 = vmatpush1.msra.mxu0 %v463
      %519 = vmatprep.subr.mxu0 0.0
      %520 = vmatpush1.msra.mxu0 %v462
      %521 = vmatprep.subr.mxu0 0.0
      %522 = vmatpush1.msra.mxu0 %v461
      %523 = vmatprep.subr.mxu0 0.0
      %524 = vmatpush1.msra.mxu0 %v460
      %525 = vmatprep.subr.mxu0 0.0
      %526 = vmatpush1.msra.mxu0 %v459
      %527 = vmatprep.subr.mxu0 0.0
      %528 = vmatpush2.msra.mxu0 0.0
      %529 = vmatprep.subr.mxu0 0.0
      %530 = vmatpush2.msra.mxu0 0.0
      %531 = vmatprep.subr.mxu0 0.0
      %532 = vmatpush2.msra.mxu0 0.0
      %533 = vmatprep.subr.mxu0 0.0
      %534 = vmatpush2.msra.mxu0 0.0
      %535 = vmatprep.subr.mxu0 0.0
      %536 = vmatpush2.msra.mxu0 0.0
      %537 = vmatprep.subr.mxu0 0.0
      %538 = vmatpush2.msra.mxu0 0.0
      %539 = vmatprep.subr.mxu0 0.0
      %540 = vmatpush2.msra.mxu0 0.0
      %541 = vmatprep.subr.mxu0 0.0
      %542 = vmatpush2.msra.mxu0 0.0
      %543 = vmatprep.subr.mxu0 0.0
      %544 = vmatpush2.msra.mxu0 0.0
      %545 = vmatprep.subr.mxu0 0.0
      %546 = vmatpush2.msra.mxu0 0.0
      %547 = vmatprep.subr.mxu0 0.0
      %548 = vmatpush2.msra.mxu0 0.0
      %549 = vmatprep.subr.mxu0 0.0
      %550 = vmatpush2.msra.mxu0 0.0
      %551 = vmatprep.subr.mxu0 0.0
      %552 = vmatpush2.msra.mxu0 0.0
      %553 = vmatprep.subr.mxu0 0.0
      %554 = vmatpush2.msra.mxu0 0.0
      %555 = vmatprep.subr.mxu0 0.0
      %556 = vmatpush2.msra.mxu0 0.0
      %557 = vmatprep.subr.mxu0 0.0
      %558 = vmatpush2.msra.mxu0 0.0
      %559 = vmatprep.mubr.f32.mxu0 0.0
      %560 = vmatmul.mubr.f32.gmra.mxu0 %v487
      %v561 = vpop.f32.mrf.mxu0
      %v562 = vadd.f32 %v473, %v561
      %v563 = vpop.f32.mrf.mxu0
      %564 = vmatprep.mubr.f32.mxu0 0.0
      %565 = vmatmul.mubr.f32.gmra.mxu0 %v490
      %v566 = vpop.f32.mrf.mxu0
      %v567 = vadd.f32 %v478, %v566
      %v568 = vpop.f32.mrf.mxu0
      %569 = vmatprep.mubr.f32.mxu0 0.0
      %570 = vmatmul.mubr.f32.gmra.mxu0 %v493
      %v571 = vpop.f32.mrf.mxu0
      %v572 = vadd.f32 %v483, %v571
      %v573 = vpop.f32.mrf.mxu0
      %574 = vdwg.mxu0
      %v575 = vmax.f32 %v562, 0.0
      %v576 = vmax.f32 %v567, 0.0
      %v577 = vmax.f32 %v572, 0.0
      %v578 = vld [vmem:[%s6] sm:$0x3]
      %v579 = vld [vmem:[%s7] sm:$0x3]
      %581 = vset.pattern.permute.xlu0 0
      %582 = vperm.xlu0 %581, %v579
      %v583 = vpop.permute.xlu0 %582
      %vm585 = vcmask 162816
      %v587 = vsel %vm585, %v578, 0
      %vm589 = vcmask 1043456
      %v591 = vsel %vm589, %v577, 0
      %593 = vmatprep.subr.mxu0 0.0
      %594 = vmatpush1.msra.mxu0 0.0
      %595 = vmatprep.subr.mxu0 0.0
      %596 = vmatpush1.msra.mxu0 0.0
      %597 = vmatprep.subr.mxu0 0.0
      %598 = vmatpush1.msra.mxu0 0.0
      %599 = vmatprep.subr.mxu0 0.0
      %600 = vmatpush1.msra.mxu0 0.0
      %601 = vmatprep.subr.mxu0 0.0
      %602 = vmatpush1.msra.mxu0 0.0
      %603 = vmatprep.subr.mxu0 0.0
      %604 = vmatpush1.msra.mxu0 0.0
      %605 = vmatprep.subr.mxu0 0.0
      %606 = vmatpush1.msra.mxu0 0.0
      %607 = vmatprep.subr.mxu0 0.0
      %608 = vmatpush1.msra.mxu0 0.0
      %609 = vmatprep.subr.mxu0 0.0
      %610 = vmatpush1.msra.mxu0 0.0
      %611 = vmatprep.subr.mxu0 0.0
      %612 = vmatpush1.msra.mxu0 0.0
      %613 = vmatprep.subr.mxu0 0.0
      %614 = vmatpush1.msra.mxu0 0.0
      %615 = vmatprep.subr.mxu0 0.0
      %616 = vmatpush1.msra.mxu0 0.0
      %617 = vmatprep.subr.mxu0 0.0
      %618 = vmatpush1.msra.mxu0 0.0
      %619 = vmatprep.subr.mxu0 0.0
      %620 = vmatpush1.msra.mxu0 %v591
      %621 = vmatprep.subr.mxu0 0.0
      %622 = vmatpush1.msra.mxu0 %v576
      %623 = vmatprep.subr.mxu0 0.0
      %624 = vmatpush1.msra.mxu0 %v575
      %625 = vmatprep.subr.mxu0 0.0
      %626 = vmatpush2.msra.mxu0 0.0
      %627 = vmatprep.subr.mxu0 0.0
      %628 = vmatpush2.msra.mxu0 0.0
      %629 = vmatprep.subr.mxu0 0.0
      %630 = vmatpush2.msra.mxu0 0.0
      %631 = vmatprep.subr.mxu0 0.0
      %632 = vmatpush2.msra.mxu0 0.0
      %633 = vmatprep.subr.mxu0 0.0
      %634 = vmatpush2.msra.mxu0 0.0
      %635 = vmatprep.subr.mxu0 0.0
      %636 = vmatpush2.msra.mxu0 0.0
      %637 = vmatprep.subr.mxu0 0.0
      %638 = vmatpush2.msra.mxu0 0.0
      %639 = vmatprep.subr.mxu0 0.0
      %640 = vmatpush2.msra.mxu0 0.0
      %641 = vmatprep.subr.mxu0 0.0
      %642 = vmatpush2.msra.mxu0 0.0
      %643 = vmatprep.subr.mxu0 0.0
      %644 = vmatpush2.msra.mxu0 0.0
      %645 = vmatprep.subr.mxu0 0.0
      %646 = vmatpush2.msra.mxu0 0.0
      %647 = vmatprep.subr.mxu0 0.0
      %648 = vmatpush2.msra.mxu0 0.0
      %649 = vmatprep.subr.mxu0 0.0
      %650 = vmatpush2.msra.mxu0 0.0
      %651 = vmatprep.subr.mxu0 0.0
      %652 = vmatpush2.msra.mxu0 0.0
      %653 = vmatprep.subr.mxu0 0.0
      %654 = vmatpush2.msra.mxu0 0.0
      %655 = vmatprep.subr.mxu0 0.0
      %656 = vmatpush2.msra.mxu0 0.0
      %657 = vmatprep.mubr.f32.mxu0 0.0
      %658 = vmatmul.mubr.f32.gmra.mxu0 %v587
      %v659 = vpop.f32.mrf.mxu0
      %v660 = vadd.f32 %v583, %v659
      %v661 = vpop.f32.mrf.mxu0
      %662 = vdwg.mxu0
      %v663 = vmul.f32 %v660, 0.5
      %v664 = vmul.f32 %v663, 1.442695
      %v665 = vpow.pop %v664
      %v666 = vadd.f32 %v665, 1e-05
      %v668 = vlaneseq
      %v669 = vshrl.u32 %v668, 7
      %v670 = vsub.s32 0, %v669
      %v671 = vrot.slane %v382, %v670
      %v673 = vmul.f32 %v666, %v671
      %v675 = vrot.slane %v673, 1
      %v677 = vadd.f32 %v660, %v675
      %678 = vst [vmem:[%s374] sm:$0x1] %v677
      %679 = vst [vmem:[%s377] sm:$0x1] %v660
      %680 = vst [vmem:[%s380 - $0x1] sm:$0x2] %v660
      %p681 = scmp.lt.s32.totalorder %s22, 2
      %s682 = scalar_select %p681, %s22, 2
      %s683 = scalar_lea.vmem %s8, %s682
      %p684 = scmp.lt.s32.totalorder %s22, 2
      %s685 = scalar_select %p684, %s22, 2
      %s686 = scalar_lea.vmem %s9, %s685
      %p687 = scmp.lt.s32.totalorder %s22, 2
      %s688 = scalar_select %p687, %s22, 2
      %s689 = scalar_lea.vmem %s10, %s688
      // Predicated region
      $region53: #{vi_forward.1} parent=51 // pred_check
        %p690 = pneg %p218
      $region54: #{vi_forward.1} parent=51 // pred_check_branch
        %692 = sbr.rel (%p690) target = $region56
      $region55: #{vi_forward.1} parent=51 // pred_region
        _
      $region56: #{vi_forward.1} parent=51 // pred_fallthru
        _
      // Predicated region
      $region57: #{vi_forward.1} parent=51 // pred_check
        %p693 = pneg %p244
      $region58: #{vi_forward.1} parent=51 // pred_check_branch
        %695 = sbr.rel (%p693) target = $region60
      $region59: #{vi_forward.1} parent=51 // pred_region
        _
      $region60: #{vi_forward.1} parent=51 // pred_fallthru
        _
      // Predicated region
      $region61: #{vi_forward.1} parent=51 // pred_check
        %p696 = pneg %p270
      $region62: #{vi_forward.1} parent=51 // pred_check_branch
        %698 = sbr.rel (%p696) target = $region64
      $region63: #{vi_forward.1} parent=51 // pred_region
        _
      $region64: #{vi_forward.1} parent=51 // pred_fallthru
        _
    $region52: #{vi_forward.1} parent=5 // pred_fallthru
      _
    %p699 = scmp.le.s32.totalorder 2, %s17
    // Predicated region
    $region65: #{vi_forward.1} parent=5 // pred_check
      %p700 = pneg %p699
    $region66: #{vi_forward.1} parent=5 // pred_check_branch
      %702 = sbr.rel (%p700) target = $region68
    $region67: #{vi_forward.1} parent=5 // pred_region
      %s703 = ssub.s32 %s17, 2
      // Predicated region
      $region69: #{vi_forward.1} parent=67 // pred_check
        %p704 = pneg %p224
      $region70: #{vi_forward.1} parent=67 // pred_check_branch
        %706 = sbr.rel (%p704) target = $region72
      $region71: #{vi_forward.1} parent=67 // pred_region
        %p707 = scmp.lt.s32.totalorder %s23, 2
        %s708 = scalar_select %p707, %s23, 2
        %s709 = scalar_lea.vmem %s8, %s708
      $region72: #{vi_forward.1} parent=67 // pred_fallthru
        _
      // Predicated region
      $region73: #{vi_forward.1} parent=67 // pred_check
        %p710 = pneg %p250
      $region74: #{vi_forward.1} parent=67 // pred_check_branch
        %712 = sbr.rel (%p710) target = $region76
      $region75: #{vi_forward.1} parent=67 // pred_region
        %p713 = scmp.lt.s32.totalorder %s23, 2
        %s714 = scalar_select %p713, %s23, 2
        %s715 = scalar_lea.vmem %s9, %s714
      $region76: #{vi_forward.1} parent=67 // pred_fallthru
        _
      // Predicated region
      $region77: #{vi_forward.1} parent=67 // pred_check
        %p716 = pneg %p276
      $region78: #{vi_forward.1} parent=67 // pred_check_branch
        %718 = sbr.rel (%p716) target = $region80
      $region79: #{vi_forward.1} parent=67 // pred_region
        %p719 = scmp.lt.s32.totalorder %s23, 2
        %s720 = scalar_select %p719, %s23, 2
        %s721 = scalar_lea.vmem %s10, %s720
      $region80: #{vi_forward.1} parent=67 // pred_fallthru
        _
    $region68: #{vi_forward.1} parent=5 // pred_fallthru
      _
  $region6: #{vi_forward.1} parent=0 // loop_footer
    %s21 = sadd.s32 1, %s17
  $region7: #{vi_forward.1} parent=0 // loop_footer_branch
    %16 = sbr.rel target = $region3
  $region8: #{vi_forward.1} parent=0 // loop_exit
    _

</llo_original>
